<compile_context>
chip_gen: v7x
topology: tpu7x:2x2x1
jax: 0.10.0
libtpu: 0.0.40
codegen_flags: <defaults>
</compile_context>

<pallas_src>
import jax
import jax.numpy as jnp
from jax.experimental import pallas as pl
from jax.experimental.pallas import tpu as pltpu


def decoder_subnet_kernel(z_ref, w1_ref, b1_ref, w2_ref, b2_ref, w3_ref, b3_ref,
                          o_ref):
    cdt = w1_ref.dtype  # matmul operand dtype (bf16 by default, f32 optional)

    # Layer 1: Linear(latent -> hidden) + Tanh (bias add / tanh kept in f32).
    h1 = jnp.tanh(
        jnp.dot(z_ref[...].astype(cdt), w1_ref[...],
                preferred_element_type=jnp.float32) + b1_ref[...])
    # Layer 2: Linear(hidden -> hidden) + Tanh
    h2 = jnp.tanh(
        jnp.dot(h1.astype(cdt), w2_ref[...],
                preferred_element_type=jnp.float32) + b2_ref[...])
    # Layer 3: Linear(hidden -> output), no activation
    out = (jnp.dot(h2.astype(cdt), w3_ref[...],
                   preferred_element_type=jnp.float32) + b3_ref[...])
    o_ref[...] = out.astype(o_ref.dtype)


def _round_up(x, m):
    return (x + m - 1) // m * m


def decoder_subnet(z, params, *, batch_tile=512, compute_dtype=jnp.bfloat16):
    """Fused forward pass of DecoderSubnet.

    z: [B, latent_dim] float32
    params: dict with w1 [latent,hidden], b1 [hidden],
                      w2 [hidden,hidden],  b2 [hidden],
                      w3 [hidden,output],  b3 [output]
    returns: [B, output_dim] float32
    """
    B, latent_dim = z.shape
    hidden_dim = params["w1"].shape[1]
    output_dim = params["w3"].shape[1]

    SUBLANE = 8

    # Batch tiling: sublane-aligned, aim for >=2 grid steps (v7x megacore),
    # tile capped at `batch_tile` rows.
    b_sub = _round_up(max(B, 1), SUBLANE)
    tile_cap = _round_up(batch_tile, SUBLANE)
    half = _round_up(-(-b_sub // 2), SUBLANE)
    tb = max(SUBLANE, min(tile_cap, half))
    b_pad = _round_up(b_sub, tb)

    zp = z if b_pad == B else jnp.pad(z, ((0, b_pad - B), (0, 0)))

    # Weights cast once to the matmul operand dtype; biases stay f32.
    w1 = params["w1"].astype(compute_dtype)
    w2 = params["w2"].astype(compute_dtype)
    w3 = params["w3"].astype(compute_dtype)
    b1 = params["b1"].reshape(1, hidden_dim).astype(jnp.float32)
    b2 = params["b2"].reshape(1, hidden_dim).astype(jnp.float32)
    b3 = params["b3"].reshape(1, output_dim).astype(jnp.float32)

    grid = (b_pad // tb,)

    # Streaming activations: tiled along batch. Resident weights/biases:
    # constant index_map -> DMA'd once, stay in VMEM.
    act_spec = lambda rows, cols: pl.BlockSpec((rows, cols), lambda i: (i, 0))
    res_spec = lambda shape: pl.BlockSpec(shape, lambda i: (0,) * len(shape))

    w_bytes = jnp.dtype(compute_dtype).itemsize
    weight_elems = (latent_dim * hidden_dim + hidden_dim * hidden_dim
                    + hidden_dim * output_dim)

    # Cost estimate reflects what is actually moved / computed.
    flops = 2 * b_pad * weight_elems
    transcendentals = 2 * b_pad * hidden_dim
    bytes_accessed = (4 * b_pad * (latent_dim + output_dim)       # z in, out out
                      + w_bytes * weight_elems                    # weights
                      + 4 * (2 * hidden_dim + output_dim))        # biases

    # Explicit scoped-VMEM budget: double-buffered z/out tiles, resident
    # weights (x2 buffers), f32 h1/h2 temporaries, plus generous headroom.
    stream_bytes = 2 * tb * (latent_dim + output_dim) * 4
    resident_bytes = 2 * (weight_elems * w_bytes
                          + 4 * (2 * hidden_dim + output_dim))
    temp_bytes = 2 * tb * hidden_dim * 4
    vmem_limit = min(2 * (stream_bytes + resident_bytes + temp_bytes)
                     + (4 << 20), 96 << 20)

    out_padded = pl.pallas_call(
        decoder_subnet_kernel,
        out_shape=jax.ShapeDtypeStruct((b_pad, output_dim), z.dtype),
        grid=grid,
        in_specs=[
            act_spec(tb, latent_dim),               # z      (streamed)
            res_spec((latent_dim, hidden_dim)),     # w1     (resident)
            res_spec((1, hidden_dim)),              # b1
            res_spec((hidden_dim, hidden_dim)),     # w2
            res_spec((1, hidden_dim)),              # b2
            res_spec((hidden_dim, output_dim)),     # w3
            res_spec((1, output_dim)),              # b3
        ],
        out_specs=act_spec(tb, output_dim),
        compiler_params=pltpu.CompilerParams(
            dimension_semantics=("parallel",),
            vmem_limit_bytes=int(vmem_limit)),
        cost_estimate=pl.CostEstimate(
            flops=flops,
            transcendentals=transcendentals,
            bytes_accessed=bytes_accessed),
    )(zp, w1, b1, w2, b2, w3, b3)

    # Slice away batch padding.
    return out_padded[:B, :]


def init_params(key, latent_dim, hidden_dim, output_dim):
    """Deterministic synthetic parameters (PyTorch-style uniform init)."""
    ks = jax.random.split(key, 6)

    def linear(kw, kb, fan_in, fan_out):
        bound = 1.0 / jnp.sqrt(fan_in)
        # Stored already transposed relative to nn.Linear: [in, out].
        w = jax.random.uniform(kw, (fan_in, fan_out), jnp.float32, -bound, bound)
        b = jax.random.uniform(kb, (fan_out,), jnp.float32, -bound, bound)
        return w, b

    w1, b1 = linear(ks[0], ks[1], latent_dim, hidden_dim)
    w2, b2 = linear(ks[2], ks[3], hidden_dim, hidden_dim)
    w3, b3 = linear(ks[4], ks[5], hidden_dim, output_dim)
    return {"w1": w1, "b1": b1, "w2": w2, "b2": b2, "w3": w3, "b3": b3}


def reference_forward(z, p):
    h1 = jnp.tanh(z @ p["w1"] + p["b1"])
    h2 = jnp.tanh(h1 @ p["w2"] + p["b2"])
    return h2 @ p["w3"] + p["b3"]


if __name__ == "__main__":
    latent_dim, hidden_dim, output_dim = 8, 32, 16
    batch = 2

    key = jax.random.PRNGKey(0)
    k_z, k_p = jax.random.split(key)
    z = jax.random.normal(k_z, (batch, latent_dim), dtype=jnp.float32)
    params = init_params(k_p, latent_dim, hidden_dim, output_dim)

    ref = reference_forward(z, params)

    # Exact path (f32 MXU operands) -> tight tolerance against the reference.
    out_f32 = jax.block_until_ready(
        decoder_subnet(z, params, compute_dtype=jnp.float32))
    assert out_f32.shape == (batch, output_dim)
    assert jnp.allclose(out_f32, ref, atol=1e-5, rtol=1e-5)

    # Default perf path (bf16 MXU operands, f32 accumulation) -> loose tolerance.
    out_bf16 = jax.block_until_ready(decoder_subnet(z, params))
    assert out_bf16.shape == (batch, output_dim)
    assert jnp.allclose(out_bf16, ref, atol=5e-2, rtol=5e-2)

    print("KERNEL_OK")
</pallas_src>

<mosaic_0001>
module attributes {stable_mosaic.version = 11 : i64} {
  func.func @decoder_subnet_kernel(%arg0: i32, %arg1: memref<8x8xf32, #tpu.memory_space<vmem>>, %arg2: memref<8x32xf32, #tpu.memory_space<vmem>>, %arg3: memref<1x32xf32, #tpu.memory_space<vmem>>, %arg4: memref<32x32xf32, #tpu.memory_space<vmem>>, %arg5: memref<1x32xf32, #tpu.memory_space<vmem>>, %arg6: memref<32x16xf32, #tpu.memory_space<vmem>>, %arg7: memref<1x16xf32, #tpu.memory_space<vmem>>, %arg8: memref<8x16xf32, #tpu.memory_space<vmem>>) attributes {dimension_semantics = [#tpu.dimension_semantics<parallel>], iteration_bounds = array<i64: 1>, scalar_prefetch = 0 : i64, scratch_operands = 0 : i64, tpu.core_type = #tpu.core_type<tc>, window_params = [{transform_indices = @transform_0, window_bounds = array<i64: 8, 8>}, {pipeline_mode = #tpu.pipeline_mode<synchronous>, transform_indices = @transform_1, window_bounds = array<i64: 8, 32>}, {pipeline_mode = #tpu.pipeline_mode<synchronous>, transform_indices = @transform_2, window_bounds = array<i64: 1, 32>}, {pipeline_mode = #tpu.pipeline_mode<synchronous>, transform_indices = @transform_3, window_bounds = array<i64: 32, 32>}, {pipeline_mode = #tpu.pipeline_mode<synchronous>, transform_indices = @transform_4, window_bounds = array<i64: 1, 32>}, {pipeline_mode = #tpu.pipeline_mode<synchronous>, transform_indices = @transform_5, window_bounds = array<i64: 32, 16>}, {pipeline_mode = #tpu.pipeline_mode<synchronous>, transform_indices = @transform_6, window_bounds = array<i64: 1, 16>}, {transform_indices = @transform_7, window_bounds = array<i64: 8, 16>}]} {
    %c0 = arith.constant 0 : index
    %c0_0 = arith.constant 0 : index
    %0 = vector.load %arg1[%c0, %c0_0] : memref<8x8xf32, #tpu.memory_space<vmem>>, vector<8x8xf32>
    %c0_1 = arith.constant 0 : index
    %c0_2 = arith.constant 0 : index
    %1 = vector.load %arg2[%c0_1, %c0_2] : memref<8x32xf32, #tpu.memory_space<vmem>>, vector<8x32xf32>
    %cst = arith.constant dense<0.000000e+00> : vector<8x32xf32>
    %2 = tpu.matmul %0, %1, %cst {dimension_numbers = #tpu.dot_dimension_numbers<[1], [0], [0], [1], [0, 0, 1, 1], [], []>} : vector<8x8xf32>, vector<8x32xf32>, vector<8x32xf32> -> vector<8x32xf32>
    %c0_3 = arith.constant 0 : index
    %c0_4 = arith.constant 0 : index
    %3 = vector.load %arg3[%c0_3, %c0_4] : memref<1x32xf32, #tpu.memory_space<vmem>>, vector<1x32xf32>
    %4 = vector.broadcast %3 : vector<1x32xf32> to vector<8x32xf32>
    %5 = arith.addf %2, %4 : vector<8x32xf32>
    %6 = math.tanh %5 : vector<8x32xf32>
    %c0_5 = arith.constant 0 : index
    %c0_6 = arith.constant 0 : index
    %7 = vector.load %arg4[%c0_5, %c0_6] : memref<32x32xf32, #tpu.memory_space<vmem>>, vector<32x32xf32>
    %cst_7 = arith.constant dense<0.000000e+00> : vector<8x32xf32>
    %8 = tpu.matmul %6, %7, %cst_7 {dimension_numbers = #tpu.dot_dimension_numbers<[1], [0], [0], [1], [0, 0, 1, 1], [], []>} : vector<8x32xf32>, vector<32x32xf32>, vector<8x32xf32> -> vector<8x32xf32>
    %c0_8 = arith.constant 0 : index
    %c0_9 = arith.constant 0 : index
    %9 = vector.load %arg5[%c0_8, %c0_9] : memref<1x32xf32, #tpu.memory_space<vmem>>, vector<1x32xf32>
    %10 = vector.broadcast %9 : vector<1x32xf32> to vector<8x32xf32>
    %11 = arith.addf %8, %10 : vector<8x32xf32>
    %12 = math.tanh %11 : vector<8x32xf32>
    %c0_10 = arith.constant 0 : index
    %c0_11 = arith.constant 0 : index
    %13 = vector.load %arg6[%c0_10, %c0_11] : memref<32x16xf32, #tpu.memory_space<vmem>>, vector<32x16xf32>
    %cst_12 = arith.constant dense<0.000000e+00> : vector<8x16xf32>
    %14 = tpu.matmul %12, %13, %cst_12 {dimension_numbers = #tpu.dot_dimension_numbers<[1], [0], [0], [1], [0, 0, 1, 1], [], []>} : vector<8x32xf32>, vector<32x16xf32>, vector<8x16xf32> -> vector<8x16xf32>
    %c0_13 = arith.constant 0 : index
    %c0_14 = arith.constant 0 : index
    %15 = vector.load %arg7[%c0_13, %c0_14] : memref<1x16xf32, #tpu.memory_space<vmem>>, vector<1x16xf32>
    %16 = vector.broadcast %15 : vector<1x16xf32> to vector<8x16xf32>
    %17 = arith.addf %14, %16 : vector<8x16xf32>
    %c0_15 = arith.constant 0 : index
    %c0_16 = arith.constant 0 : index
    %18 = vector.load %arg8[%c0_15, %c0_16] : memref<8x16xf32, #tpu.memory_space<vmem>>, vector<8x16xf32>
    tpu.vector_store %arg8[%c0_15, %c0_16], %17 {strides = array<i32>} : memref<8x16xf32, #tpu.memory_space<vmem>>, vector<8x16xf32>,
    return
  }
  func.func @transform_0(%arg0: i32) -> (i32, i32) {
    %c0_i32 = arith.constant 0 : i32
    %c0_i32_0 = arith.constant 0 : i32
    return %arg0, %c0_i32 : i32, i32
  }
  func.func @transform_1(%arg0: i32) -> (i32, i32) {
    %c0_i32 = arith.constant 0 : i32
    %c0_i32_0 = arith.constant 0 : i32
    %c0_i32_1 = arith.constant 0 : i32
    return %c0_i32, %c0_i32_0 : i32, i32
  }
  func.func @transform_2(%arg0: i32) -> (i32, i32) {
    %c0_i32 = arith.constant 0 : i32
    %c0_i32_0 = arith.constant 0 : i32
    %c0_i32_1 = arith.constant 0 : i32
    return %c0_i32, %c0_i32_0 : i32, i32
  }
  func.func @transform_3(%arg0: i32) -> (i32, i32) {
    %c0_i32 = arith.constant 0 : i32
    %c0_i32_0 = arith.constant 0 : i32
    %c0_i32_1 = arith.constant 0 : i32
    return %c0_i32, %c0_i32_0 : i32, i32
  }
  func.func @transform_4(%arg0: i32) -> (i32, i32) {
    %c0_i32 = arith.constant 0 : i32
    %c0_i32_0 = arith.constant 0 : i32
    %c0_i32_1 = arith.constant 0 : i32
    return %c0_i32, %c0_i32_0 : i32, i32
  }
  func.func @transform_5(%arg0: i32) -> (i32, i32) {
    %c0_i32 = arith.constant 0 : i32
    %c0_i32_0 = arith.constant 0 : i32
    %c0_i32_1 = arith.constant 0 : i32
    return %c0_i32, %c0_i32_0 : i32, i32
  }
  func.func @transform_6(%arg0: i32) -> (i32, i32) {
    %c0_i32 = arith.constant 0 : i32
    %c0_i32_0 = arith.constant 0 : i32
    %c0_i32_1 = arith.constant 0 : i32
    return %c0_i32, %c0_i32_0 : i32, i32
  }
  func.func @transform_7(%arg0: i32) -> (i32, i32) {
    %c0_i32 = arith.constant 0 : i32
    %c0_i32_0 = arith.constant 0 : i32
    return %arg0, %c0_i32 : i32, i32
  }
}

</mosaic_0001>

<llo_original>
// kernel: tpu_custom_call.1
$region0: #{tpu_custom_call.1}
  #allocation0 [shape = 'u32[]', space=smem, size = 0x4, offset = 0x4, fixed_abs, tag = 'smem constant byte address 0x4 - core index']
  #allocation1 [shape = 'u32[144,128]{1,0:T(1,128)}', space=vmem, size = 0x12000, scoped, tag = 'internal scratch']
  %s0 = inlined_call_operand.vmem [shape: f32[8,8], index: 0, kind: input, shape index: {}]
  %s1 = inlined_call_operand.vmem [shape: f32[8,32], index: 1, kind: input, shape index: {}]
  %s2 = inlined_call_operand.vmem [shape: f32[1,32], index: 2, kind: input, shape index: {}]
  %s3 = inlined_call_operand.vmem [shape: f32[32,32], index: 3, kind: input, shape index: {}]
  %s4 = inlined_call_operand.vmem [shape: f32[1,32], index: 4, kind: input, shape index: {}]
  %s5 = inlined_call_operand.vmem [shape: f32[32,16], index: 5, kind: input, shape index: {}]
  %s6 = inlined_call_operand.vmem [shape: f32[1,16], index: 6, kind: input, shape index: {}]
  %s7 = inlined_call_operand.hbm [shape: f32[8,16], index: 7, kind: output, shape index: {}]
  %s8 = sld [smem:[#allocation0]]
  $region38: #{tpu_custom_call.1} parent=0
    _
  %s10 = ssub.s32 1, %s8
  %s11 = scalar_select 0, %s10, %s8
  $region1: #{tpu_custom_call.1} parent=0
    #allocation2 [shape = 'u8[4096]{0}', space=vmem, size = 0x1000, scoped, tag = 'output window, operand 0, single buffered']
    #allocation3 [shape = 's32[1]{0}', space=sflag, size = 0x4, scoped, tag = 'scoped memory for tpu_custom_call.1']
    %12 = vsyncpa [#allocation3], 0
    // Predicated region
    $region2: #{tpu_custom_call.1} parent=1 // pred_check
      _
    $region3: #{tpu_custom_call.1} parent=1 // pred_check_branch
      %14 = sbr.rel (0) target = $region5
    $region4: #{tpu_custom_call.1} parent=1 // pred_region
      _
    $region5: #{tpu_custom_call.1} parent=1 // pred_fallthru
      _
    // Predicated region
    $region6: #{tpu_custom_call.1} parent=1 // pred_check
      _
    $region7: #{tpu_custom_call.1} parent=1 // pred_check_branch
      %16 = sbr.rel (0) target = $region9
    $region8: #{tpu_custom_call.1} parent=1 // pred_region
      _
    $region9: #{tpu_custom_call.1} parent=1 // pred_fallthru
      _
    // Predicated region
    $region10: #{tpu_custom_call.1} parent=1 // pred_check
      _
    $region11: #{tpu_custom_call.1} parent=1 // pred_check_branch
      %18 = sbr.rel (0) target = $region13
    $region12: #{tpu_custom_call.1} parent=1 // pred_region
      _
    $region13: #{tpu_custom_call.1} parent=1 // pred_fallthru
      _
    // Predicated region
    $region14: #{tpu_custom_call.1} parent=1 // pred_check
      _
    $region15: #{tpu_custom_call.1} parent=1 // pred_check_branch
      %20 = sbr.rel (0) target = $region17
    $region16: #{tpu_custom_call.1} parent=1 // pred_region
      _
    $region17: #{tpu_custom_call.1} parent=1 // pred_fallthru
      _
    // Predicated region
    $region18: #{tpu_custom_call.1} parent=1 // pred_check
      _
    $region19: #{tpu_custom_call.1} parent=1 // pred_check_branch
      %22 = sbr.rel (0) target = $region21
    $region20: #{tpu_custom_call.1} parent=1 // pred_region
      _
    $region21: #{tpu_custom_call.1} parent=1 // pred_fallthru
      _
    // Predicated region
    $region22: #{tpu_custom_call.1} parent=1 // pred_check
      _
    $region23: #{tpu_custom_call.1} parent=1 // pred_check_branch
      %24 = sbr.rel (0) target = $region25
    $region24: #{tpu_custom_call.1} parent=1 // pred_region
      _
    $region25: #{tpu_custom_call.1} parent=1 // pred_fallthru
      _
    // Predicated region
    $region26: #{tpu_custom_call.1} parent=1 // pred_check
      _
    $region27: #{tpu_custom_call.1} parent=1 // pred_check_branch
      %26 = sbr.rel (0) target = $region29
    $region28: #{tpu_custom_call.1} parent=1 // pred_region
      _
    $region29: #{tpu_custom_call.1} parent=1 // pred_fallthru
      _
    %v27 = vld [vmem:[%s0] sm:$0xff]
    %v28 = vld [vmem:[%s1] sm:$0xff]
    %v29 = vld [vmem:[%s2] sm:$0x1]
    %v31 = vlaneseq
    %v32 = vshrl.u32 %v31, 7
    %v33 = vsub.s32 0, %v32
    %v34 = vrot.slane %v29, %v33
    %vm36 = vcmask 64512
    %v38 = vsel %vm36, %v27, 0
    %40 = vmatprep.subr.mxu0 0.0
    %41 = vmatpush1.msra.mxu0 %v28
    %42 = vmatprep.subr.mxu0 0.0
    %43 = vmatpush1.msra.mxu0 0.0
    %44 = vmatprep.subr.mxu0 0.0
    %45 = vmatpush1.msra.mxu0 0.0
    %46 = vmatprep.subr.mxu0 0.0
    %47 = vmatpush1.msra.mxu0 0.0
    %48 = vmatprep.subr.mxu0 0.0
    %49 = vmatpush1.msra.mxu0 0.0
    %50 = vmatprep.subr.mxu0 0.0
    %51 = vmatpush1.msra.mxu0 0.0
    %52 = vmatprep.subr.mxu0 0.0
    %53 = vmatpush1.msra.mxu0 0.0
    %54 = vmatprep.subr.mxu0 0.0
    %55 = vmatpush1.msra.mxu0 0.0
    %56 = vmatprep.subr.mxu0 0.0
    %57 = vmatpush1.msra.mxu0 0.0
    %58 = vmatprep.subr.mxu0 0.0
    %59 = vmatpush1.msra.mxu0 0.0
    %60 = vmatprep.subr.mxu0 0.0
    %61 = vmatpush1.msra.mxu0 0.0
    %62 = vmatprep.subr.mxu0 0.0
    %63 = vmatpush1.msra.mxu0 0.0
    %64 = vmatprep.subr.mxu0 0.0
    %65 = vmatpush1.msra.mxu0 0.0
    %66 = vmatprep.subr.mxu0 0.0
    %67 = vmatpush1.msra.mxu0 0.0
    %68 = vmatprep.subr.mxu0 0.0
    %69 = vmatpush1.msra.mxu0 0.0
    %70 = vmatprep.subr.mxu0 0.0
    %71 = vmatpush1.msra.mxu0 0.0
    %72 = vmatprep.subr.mxu0 0.0
    %73 = vmatpush1.msra.mxu0 0.0
    %74 = vmatprep.subr.mxu0 0.0
    %75 = vmatpush1.msra.mxu0 0.0
    %76 = vmatprep.subr.mxu0 0.0
    %77 = vmatpush1.msra.mxu0 0.0
    %78 = vmatprep.subr.mxu0 0.0
    %79 = vmatpush1.msra.mxu0 0.0
    %80 = vmatprep.subr.mxu0 0.0
    %81 = vmatpush1.msra.mxu0 0.0
    %82 = vmatprep.subr.mxu0 0.0
    %83 = vmatpush1.msra.mxu0 0.0
    %84 = vmatprep.subr.mxu0 0.0
    %85 = vmatpush1.msra.mxu0 0.0
    %86 = vmatprep.subr.mxu0 0.0
    %87 = vmatpush1.msra.mxu0 0.0
    %88 = vmatprep.subr.mxu0 0.0
    %89 = vmatpush1.msra.mxu0 0.0
    %90 = vmatprep.subr.mxu0 0.0
    %91 = vmatpush1.msra.mxu0 0.0
    %92 = vmatprep.subr.mxu0 0.0
    %93 = vmatpush1.msra.mxu0 0.0
    %94 = vmatprep.subr.mxu0 0.0
    %95 = vmatpush1.msra.mxu0 0.0
    %96 = vmatprep.subr.mxu0 0.0
    %97 = vmatpush1.msra.mxu0 0.0
    %98 = vmatprep.subr.mxu0 0.0
    %99 = vmatpush1.msra.mxu0 0.0
    %100 = vmatprep.subr.mxu0 0.0
    %101 = vmatpush1.msra.mxu0 0.0
    %102 = vmatprep.subr.mxu0 0.0
    %103 = vmatpush1.msra.mxu0 0.0
    %104 = vmatprep.mubr.f32.mxu0 0.0
    %105 = vmatmul.mubr.f32.gmra.mrb[0].mxu0 %v38
    %v106 = vpop.f32.mrb[0].mxu0
    %v107 = vadd.f32 %v34, %v106
    %v108 = vpop.f32.mrb[0].mxu0
    %109 = vdwg.mxu0
    %v110 = vtanh.pop %v107
    %v111 = vld [vmem:[%s3] sm:$0xff]
    %v112 = vld [vmem:[%s3 + $0x8] sm:$0xff]
    %v113 = vld [vmem:[%s3 + $0x10] sm:$0xff]
    %v114 = vld [vmem:[%s3 + $0x18] sm:$0xff]
    %v115 = vld [vmem:[%s4] sm:$0x1]
    %v117 = vlaneseq
    %v118 = vshrl.u32 %v117, 7
    %v119 = vsub.s32 0, %v118
    %v120 = vrot.slane %v115, %v119
    %vm122 = vcmask 261120
    %v124 = vsel %vm122, %v110, 0
    %126 = vmatprep.subr.mxu0 0.0
    %127 = vmatpush1.msra.mxu0 %v111
    %128 = vmatprep.subr.mxu0 0.0
    %129 = vmatpush1.msra.mxu0 %v112
    %130 = vmatprep.subr.mxu0 0.0
    %131 = vmatpush1.msra.mxu0 %v113
    %132 = vmatprep.subr.mxu0 0.0
    %133 = vmatpush1.msra.mxu0 %v114
    %134 = vmatprep.subr.mxu0 0.0
    %135 = vmatpush1.msra.mxu0 0.0
    %136 = vmatprep.subr.mxu0 0.0
    %137 = vmatpush1.msra.mxu0 0.0
    %138 = vmatprep.subr.mxu0 0.0
    %139 = vmatpush1.msra.mxu0 0.0
    %140 = vmatprep.subr.mxu0 0.0
    %141 = vmatpush1.msra.mxu0 0.0
    %142 = vmatprep.subr.mxu0 0.0
    %143 = vmatpush1.msra.mxu0 0.0
    %144 = vmatprep.subr.mxu0 0.0
    %145 = vmatpush1.msra.mxu0 0.0
    %146 = vmatprep.subr.mxu0 0.0
    %147 = vmatpush1.msra.mxu0 0.0
    %148 = vmatprep.subr.mxu0 0.0
    %149 = vmatpush1.msra.mxu0 0.0
    %150 = vmatprep.subr.mxu0 0.0
    %151 = vmatpush1.msra.mxu0 0.0
    %152 = vmatprep.subr.mxu0 0.0
    %153 = vmatpush1.msra.mxu0 0.0
    %154 = vmatprep.subr.mxu0 0.0
    %155 = vmatpush1.msra.mxu0 0.0
    %156 = vmatprep.subr.mxu0 0.0
    %157 = vmatpush1.msra.mxu0 0.0
    %158 = vmatprep.subr.mxu0 0.0
    %159 = vmatpush1.msra.mxu0 0.0
    %160 = vmatprep.subr.mxu0 0.0
    %161 = vmatpush1.msra.mxu0 0.0
    %162 = vmatprep.subr.mxu0 0.0
    %163 = vmatpush1.msra.mxu0 0.0
    %164 = vmatprep.subr.mxu0 0.0
    %165 = vmatpush1.msra.mxu0 0.0
    %166 = vmatprep.subr.mxu0 0.0
    %167 = vmatpush1.msra.mxu0 0.0
    %168 = vmatprep.subr.mxu0 0.0
    %169 = vmatpush1.msra.mxu0 0.0
    %170 = vmatprep.subr.mxu0 0.0
    %171 = vmatpush1.msra.mxu0 0.0
    %172 = vmatprep.subr.mxu0 0.0
    %173 = vmatpush1.msra.mxu0 0.0
    %174 = vmatprep.subr.mxu0 0.0
    %175 = vmatpush1.msra.mxu0 0.0
    %176 = vmatprep.subr.mxu0 0.0
    %177 = vmatpush1.msra.mxu0 0.0
    %178 = vmatprep.subr.mxu0 0.0
    %179 = vmatpush1.msra.mxu0 0.0
    %180 = vmatprep.subr.mxu0 0.0
    %181 = vmatpush1.msra.mxu0 0.0
    %182 = vmatprep.subr.mxu0 0.0
    %183 = vmatpush1.msra.mxu0 0.0
    %184 = vmatprep.subr.mxu0 0.0
    %185 = vmatpush1.msra.mxu0 0.0
    %186 = vmatprep.subr.mxu0 0.0
    %187 = vmatpush1.msra.mxu0 0.0
    %188 = vmatprep.subr.mxu0 0.0
    %189 = vmatpush1.msra.mxu0 0.0
    %190 = vmatprep.mubr.f32.mxu0 0.0
    %191 = vmatmul.mubr.f32.gmra.mrb[0].mxu0 %v124
    %v192 = vpop.f32.mrb[0].mxu0
    %v193 = vadd.f32 %v120, %v192
    %v194 = vpop.f32.mrb[0].mxu0
    %195 = vdwg.mxu0
    %v196 = vtanh.pop %v193
    %v197 = vld [vmem:[%s5] sm:$0xff]
    %v198 = vld [vmem:[%s5 + $0x8] sm:$0xff]
    %v199 = vld [vmem:[%s5 + $0x10] sm:$0xff]
    %v200 = vld [vmem:[%s5 + $0x18] sm:$0xff]
    %v201 = vld [vmem:[%s6] sm:$0x1]
    %v203 = vlaneseq
    %v204 = vshrl.u32 %v203, 7
    %v205 = vsub.s32 0, %v204
    %v206 = vrot.slane %v201, %v205
    %v209 = vsel %vm122, %v196, 0
    %211 = vmatprep.subr.mxu0 0.0
    %212 = vmatpush1.msra.mxu0 %v197
    %213 = vmatprep.subr.mxu0 0.0
    %214 = vmatpush1.msra.mxu0 %v198
    %215 = vmatprep.subr.mxu0 0.0
    %216 = vmatpush1.msra.mxu0 %v199
    %217 = vmatprep.subr.mxu0 0.0
    %218 = vmatpush1.msra.mxu0 %v200
    %219 = vmatprep.subr.mxu0 0.0
    %220 = vmatpush1.msra.mxu0 0.0
    %221 = vmatprep.subr.mxu0 0.0
    %222 = vmatpush1.msra.mxu0 0.0
    %223 = vmatprep.subr.mxu0 0.0
    %224 = vmatpush1.msra.mxu0 0.0
    %225 = vmatprep.subr.mxu0 0.0
    %226 = vmatpush1.msra.mxu0 0.0
    %227 = vmatprep.subr.mxu0 0.0
    %228 = vmatpush1.msra.mxu0 0.0
    %229 = vmatprep.subr.mxu0 0.0
    %230 = vmatpush1.msra.mxu0 0.0
    %231 = vmatprep.subr.mxu0 0.0
    %232 = vmatpush1.msra.mxu0 0.0
    %233 = vmatprep.subr.mxu0 0.0
    %234 = vmatpush1.msra.mxu0 0.0
    %235 = vmatprep.subr.mxu0 0.0
    %236 = vmatpush1.msra.mxu0 0.0
    %237 = vmatprep.subr.mxu0 0.0
    %238 = vmatpush1.msra.mxu0 0.0
    %239 = vmatprep.subr.mxu0 0.0
    %240 = vmatpush1.msra.mxu0 0.0
    %241 = vmatprep.subr.mxu0 0.0
    %242 = vmatpush1.msra.mxu0 0.0
    %243 = vmatprep.subr.mxu0 0.0
    %244 = vmatpush1.msra.mxu0 0.0
    %245 = vmatprep.subr.mxu0 0.0
    %246 = vmatpush1.msra.mxu0 0.0
    %247 = vmatprep.subr.mxu0 0.0
    %248 = vmatpush1.msra.mxu0 0.0
    %249 = vmatprep.subr.mxu0 0.0
    %250 = vmatpush1.msra.mxu0 0.0
    %251 = vmatprep.subr.mxu0 0.0
    %252 = vmatpush1.msra.mxu0 0.0
    %253 = vmatprep.subr.mxu0 0.0
    %254 = vmatpush1.msra.mxu0 0.0
    %255 = vmatprep.subr.mxu0 0.0
    %256 = vmatpush1.msra.mxu0 0.0
    %257 = vmatprep.subr.mxu0 0.0
    %258 = vmatpush1.msra.mxu0 0.0
    %259 = vmatprep.subr.mxu0 0.0
    %260 = vmatpush1.msra.mxu0 0.0
    %261 = vmatprep.subr.mxu0 0.0
    %262 = vmatpush1.msra.mxu0 0.0
    %263 = vmatprep.subr.mxu0 0.0
    %264 = vmatpush1.msra.mxu0 0.0
    %265 = vmatprep.subr.mxu0 0.0
    %266 = vmatpush1.msra.mxu0 0.0
    %267 = vmatprep.subr.mxu0 0.0
    %268 = vmatpush1.msra.mxu0 0.0
    %269 = vmatprep.subr.mxu0 0.0
    %270 = vmatpush1.msra.mxu0 0.0
    %271 = vmatprep.subr.mxu0 0.0
    %272 = vmatpush1.msra.mxu0 0.0
    %273 = vmatprep.subr.mxu0 0.0
    %274 = vmatpush1.msra.mxu0 0.0
    %275 = vmatprep.mubr.f32.mxu0 0.0
    %276 = vmatmul.mubr.f32.gmra.mrb[0].mxu0 %v209
    %v277 = vpop.f32.mrb[0].mxu0
    %v278 = vadd.f32 %v206, %v277
    %v279 = vpop.f32.mrb[0].mxu0
    %280 = vdwg.mxu0
    %vm281 = vcmask 130048
    %282 = vst.msk [vmem:[#allocation2] sm:$0xff] %vm281, %v278
    // Predicated region
    $region30: #{tpu_custom_call.1} parent=1 // pred_check
      _
    $region31: #{tpu_custom_call.1} parent=1 // pred_check_branch
      %284 = sbr.rel (0) target = $region33
    $region32: #{tpu_custom_call.1} parent=1 // pred_region
      %s286 = ssub.s32 128, 128
      %287 = vsyncadd [#allocation3], %s286
      %s289 = sshll.u32 [#allocation2], 4
      %s290 = int_to_ptr.vmem [resolvable:$true] %s289
      %292 = dma.vmem_to_hbm [thread:$0]  %s290, 128, %s7, [#allocation3]
    $region33: #{tpu_custom_call.1} parent=1 // pred_fallthru
      _
    // Predicated region
    $region34: #{tpu_custom_call.1} parent=1 // pred_check
      _
    $region35: #{tpu_custom_call.1} parent=1 // pred_check_branch
      %294 = sbr.rel (0) target = $region37
    $region36: #{tpu_custom_call.1} parent=1 // pred_region
      %295 = dma.done [#allocation3], 128
    $region37: #{tpu_custom_call.1} parent=1 // pred_fallthru
      _
    %296 = vsyncpa [#allocation3], 1

</llo_original>
